<compile_context>
chip_gen: v5e
topology: v5e:2x2
jax: 0.10.0
libtpu: 0.0.40
codegen_flags: <defaults>
</compile_context>

<pallas_src>
import jax
import jax.numpy as jnp
from jax import lax
from jax.experimental import pallas as pl
from jax.experimental.pallas import tpu as pltpu

HIDDEN = 100        # nn.Linear(state_dim, 100)
HIDDEN_PAD = 128    # padded to one full lane width


def _round_up(x, m):
    return (x + m - 1) // m * m


def actor_kernel(s_ref, w1_ref, b1_ref, w2t_ref, b2_ref, o_ref):
    # Layer 1: Linear(state_dim, HIDDEN_PAD) + LeakyReLU(0.2).  h: (TB, 128)
    h = jnp.dot(s_ref[...], w1_ref[...], preferred_element_type=jnp.float32)
    h = h + b1_ref[...]                       # (TB, 128) + (1, 128)
    h = jnp.where(h > 0, h, 0.2 * h)

    # Layer 2, computed transposed so the output tile is lane-dense:
    #   y^T = W2_pad^T @ h^T  -> (A, TB); contract the hidden (last) dims.
    yt = lax.dot_general(
        w2t_ref[...], h,
        dimension_numbers=(((1,), (1,)), ((), ())),
        preferred_element_type=jnp.float32,
    )
    yt = yt + b2_ref[...]                     # (A, TB) + (A, 1)
    o_ref[...] = (jnp.tanh(yt) * 2.0).astype(o_ref.dtype)


def actor_forward(s, w1, b1, w2, b2, *, max_block_rows=2048):
    """s: (B, state_dim) f32. w1: (state_dim, 100), b1: (100,),
    w2: (100, action_dim), b2: (action_dim,). Returns (B, action_dim) f32."""
    B, state_dim = s.shape
    hidden, action_dim = w2.shape
    assert hidden == HIDDEN and w1.shape == (state_dim, hidden)

    # Zero-pad hidden 100 -> 128: padded units have zero weights and zero bias,
    # LeakyReLU(0) = 0, and zero rows in W2^T, so they contribute nothing.
    hpad = HIDDEN_PAD - hidden
    w1p = jnp.pad(w1.astype(jnp.float32), ((0, 0), (0, hpad)))            # (S, 128)
    b1p = jnp.pad(b1.astype(jnp.float32), (0, hpad)).reshape(1, HIDDEN_PAD)
    w2t = jnp.pad(w2.astype(jnp.float32).T, ((0, 0), (0, hpad)))          # (A, 128)
    b2c = b2.astype(jnp.float32).reshape(action_dim, 1)                   # (A, 1)

    # Batch tiling: large streaming tiles, padded with zero rows (sliced off).
    tb = min(max_block_rows, _round_up(B, 256))
    b_pad = _round_up(B, tb)
    s_p = s.astype(jnp.float32)
    if b_pad != B:
        s_p = jnp.pad(s_p, ((0, b_pad - B), (0, 0)))

    out_t = pl.pallas_call(
        actor_kernel,
        out_shape=jax.ShapeDtypeStruct((action_dim, b_pad), jnp.float32),
        grid=(b_pad // tb,),
        in_specs=[
            pl.BlockSpec((tb, state_dim), lambda i: (i, 0)),              # batch tile
            pl.BlockSpec((state_dim, HIDDEN_PAD), lambda i: (0, 0)),      # resident
            pl.BlockSpec((1, HIDDEN_PAD), lambda i: (0, 0)),              # resident
            pl.BlockSpec((action_dim, HIDDEN_PAD), lambda i: (0, 0)),     # resident
            pl.BlockSpec((action_dim, 1), lambda i: (0, 0)),              # resident
        ],
        out_specs=pl.BlockSpec((action_dim, tb), lambda i: (0, i)),
        compiler_params=pltpu.CompilerParams(
            dimension_semantics=("parallel",),
            vmem_limit_bytes=32 * 1024 * 1024,
        ),
    )(s_p, w1p, b1p, w2t, b2c)

    return out_t[:, :B].T                                                  # (B, A)


def actor_reference(s, w1, b1, w2, b2):
    h = s @ w1 + b1
    h = jnp.where(h > 0, h, 0.2 * h)
    return jnp.tanh(h @ w2 + b2) * 2.0


def init_params(key, state_dim, action_dim):
    """PyTorch-style init: U(-1/sqrt(fan_in), 1/sqrt(fan_in))."""
    k1, k2, k3, k4 = jax.random.split(key, 4)
    bound1 = 1.0 / jnp.sqrt(state_dim)
    bound2 = 1.0 / jnp.sqrt(HIDDEN)
    w1 = jax.random.uniform(k1, (state_dim, HIDDEN), jnp.float32, -bound1, bound1)
    b1 = jax.random.uniform(k2, (HIDDEN,), jnp.float32, -bound1, bound1)
    w2 = jax.random.uniform(k3, (HIDDEN, action_dim), jnp.float32, -bound2, bound2)
    b2 = jax.random.uniform(k4, (action_dim,), jnp.float32, -bound2, bound2)
    return w1, b1, w2, b2


# TODO(synk): optimizer / checkpoint save-load / device placement from the
# PyTorch module are training/infra concerns, not part of forward().

if __name__ == "__main__":
    key = jax.random.PRNGKey(0)
    k_s, k_p, k_s2 = jax.random.split(key, 3)

    state_dim, action_dim = 8, 4
    w1, b1, w2, b2 = init_params(k_p, state_dim, action_dim)

    # Small case matching the module's typical single-env use (single tile).
    s = jax.random.normal(k_s, (2, state_dim), jnp.float32)
    out = jax.block_until_ready(actor_forward(s, w1, b1, w2, b2))
    ref = actor_reference(s, w1, b1, w2, b2)
    assert out.shape == (2, action_dim)
    assert jnp.allclose(out, ref, atol=2e-5), "mismatch vs reference (single tile)"

    # Larger batch forcing multiple grid steps (exercises streaming/pipelining).
    s2 = jax.random.normal(k_s2, (300, state_dim), jnp.float32)
    out2 = jax.block_until_ready(actor_forward(s2, w1, b1, w2, b2, max_block_rows=128))
    ref2 = actor_reference(s2, w1, b1, w2, b2)
    assert out2.shape == (300, action_dim)
    assert jnp.allclose(out2, ref2, atol=2e-5), "mismatch vs reference (multi tile)"

    print("KERNEL_OK")
</pallas_src>

<mosaic_0001>
module attributes {stable_mosaic.version = 11 : i64} {
  func.func @actor_kernel(%arg0: i32, %arg1: memref<256x8xf32, #tpu.memory_space<vmem>>, %arg2: memref<8x128xf32, #tpu.memory_space<vmem>>, %arg3: memref<1x128xf32, #tpu.memory_space<vmem>>, %arg4: memref<4x128xf32, #tpu.memory_space<vmem>>, %arg5: memref<4x1xf32, #tpu.memory_space<vmem>>, %arg6: memref<4x256xf32, #tpu.memory_space<vmem>>) attributes {dimension_semantics = [#tpu.dimension_semantics<parallel>], iteration_bounds = array<i64: 1>, scalar_prefetch = 0 : i64, scratch_operands = 0 : i64, tpu.core_type = #tpu.core_type<tc>, window_params = [{transform_indices = @transform_0, window_bounds = array<i64: 256, 8>}, {pipeline_mode = #tpu.pipeline_mode<synchronous>, transform_indices = @transform_1, window_bounds = array<i64: 8, 128>}, {pipeline_mode = #tpu.pipeline_mode<synchronous>, transform_indices = @transform_2, window_bounds = array<i64: 1, 128>}, {pipeline_mode = #tpu.pipeline_mode<synchronous>, transform_indices = @transform_3, window_bounds = array<i64: 4, 128>}, {pipeline_mode = #tpu.pipeline_mode<synchronous>, transform_indices = @transform_4, window_bounds = array<i64: 4, 1>}, {transform_indices = @transform_5, window_bounds = array<i64: 4, 256>}]} {
    %c0 = arith.constant 0 : index
    %c0_0 = arith.constant 0 : index
    %0 = vector.load %arg1[%c0, %c0_0] : memref<256x8xf32, #tpu.memory_space<vmem>>, vector<256x8xf32>
    %c0_1 = arith.constant 0 : index
    %c0_2 = arith.constant 0 : index
    %1 = vector.load %arg2[%c0_1, %c0_2] : memref<8x128xf32, #tpu.memory_space<vmem>>, vector<8x128xf32>
    %cst = arith.constant dense<0.000000e+00> : vector<256x128xf32>
    %2 = tpu.matmul %0, %1, %cst {dimension_numbers = #tpu.dot_dimension_numbers<[1], [0], [0], [1], [0, 0, 1, 1], [], []>} : vector<256x8xf32>, vector<8x128xf32>, vector<256x128xf32> -> vector<256x128xf32>
    %c0_3 = arith.constant 0 : index
    %c0_4 = arith.constant 0 : index
    %3 = vector.load %arg3[%c0_3, %c0_4] : memref<1x128xf32, #tpu.memory_space<vmem>>, vector<1x128xf32>
    %4 = vector.broadcast %3 : vector<1x128xf32> to vector<256x128xf32>
    %5 = arith.addf %2, %4 : vector<256x128xf32>
    %cst_5 = arith.constant 0.000000e+00 : f32
    %6 = vector.broadcast %cst_5 : f32 to vector<256x128xf32>
    %7 = arith.cmpf ogt, %5, %6 : vector<256x128xf32>
    %cst_6 = arith.constant 2.000000e-01 : f32
    %8 = vector.broadcast %cst_6 : f32 to vector<256x128xf32>
    %9 = arith.mulf %8, %5 : vector<256x128xf32>
    %10 = arith.select %7, %5, %9 : vector<256x128xi1>, vector<256x128xf32>
    %c0_7 = arith.constant 0 : index
    %c0_8 = arith.constant 0 : index
    %11 = vector.load %arg4[%c0_7, %c0_8] : memref<4x128xf32, #tpu.memory_space<vmem>>, vector<4x128xf32>
    %cst_9 = arith.constant dense<0.000000e+00> : vector<4x256xf32>
    %12 = tpu.matmul %11, %10, %cst_9 {dimension_numbers = #tpu.dot_dimension_numbers<[1], [1], [0], [0], [0, 0, 1, 0], [], []>} : vector<4x128xf32>, vector<256x128xf32>, vector<4x256xf32> -> vector<4x256xf32>
    %c0_10 = arith.constant 0 : index
    %c0_11 = arith.constant 0 : index
    %13 = vector.load %arg5[%c0_10, %c0_11] : memref<4x1xf32, #tpu.memory_space<vmem>>, vector<4x1xf32>
    %14 = vector.broadcast %13 : vector<4x1xf32> to vector<4x256xf32>
    %15 = arith.addf %12, %14 : vector<4x256xf32>
    %16 = math.tanh %15 : vector<4x256xf32>
    %cst_12 = arith.constant 2.000000e+00 : f32
    %17 = vector.broadcast %cst_12 : f32 to vector<4x256xf32>
    %18 = arith.mulf %16, %17 : vector<4x256xf32>
    %c0_13 = arith.constant 0 : index
    %c0_14 = arith.constant 0 : index
    %19 = vector.load %arg6[%c0_13, %c0_14] : memref<4x256xf32, #tpu.memory_space<vmem>>, vector<4x256xf32>
    tpu.vector_store %arg6[%c0_13, %c0_14], %18 {strides = array<i32>} : memref<4x256xf32, #tpu.memory_space<vmem>>, vector<4x256xf32>,
    return
  }
  func.func @transform_0(%arg0: i32) -> (i32, i32) {
    %c0_i32 = arith.constant 0 : i32
    %c0_i32_0 = arith.constant 0 : i32
    return %arg0, %c0_i32 : i32, i32
  }
  func.func @transform_1(%arg0: i32) -> (i32, i32) {
    %c0_i32 = arith.constant 0 : i32
    %c0_i32_0 = arith.constant 0 : i32
    %c0_i32_1 = arith.constant 0 : i32
    return %c0_i32, %c0_i32_0 : i32, i32
  }
  func.func @transform_2(%arg0: i32) -> (i32, i32) {
    %c0_i32 = arith.constant 0 : i32
    %c0_i32_0 = arith.constant 0 : i32
    %c0_i32_1 = arith.constant 0 : i32
    return %c0_i32, %c0_i32_0 : i32, i32
  }
  func.func @transform_3(%arg0: i32) -> (i32, i32) {
    %c0_i32 = arith.constant 0 : i32
    %c0_i32_0 = arith.constant 0 : i32
    %c0_i32_1 = arith.constant 0 : i32
    return %c0_i32, %c0_i32_0 : i32, i32
  }
  func.func @transform_4(%arg0: i32) -> (i32, i32) {
    %c0_i32 = arith.constant 0 : i32
    %c0_i32_0 = arith.constant 0 : i32
    %c0_i32_1 = arith.constant 0 : i32
    return %c0_i32, %c0_i32_0 : i32, i32
  }
  func.func @transform_5(%arg0: i32) -> (i32, i32) {
    %c0_i32 = arith.constant 0 : i32
    %c0_i32_0 = arith.constant 0 : i32
    return %c0_i32, %arg0 : i32, i32
  }
}

</mosaic_0001>

<llo_original>
// kernel: tpu_custom_call.1
$region0: #{tpu_custom_call.1}
  #allocation0 [shape = 'u32[]', space=smem, size = 0x4, offset = 0x4, fixed_abs, tag = 'smem constant byte address 0x4 - core index']
  #allocation1 [shape = 'u32[72,128]{1,0:T(1,128)}', space=vmem, size = 0x9000, scoped, tag = 'internal scratch']
  %s0 = inlined_call_operand.vmem [shape: f32[256,8], index: 0, kind: input, shape index: {}]
  %s1 = inlined_call_operand.vmem [shape: f32[8,128], index: 1, kind: input, shape index: {}]
  %s2 = inlined_call_operand.vmem [shape: f32[1,128], index: 2, kind: input, shape index: {}]
  %s3 = inlined_call_operand.vmem [shape: f32[4,128], index: 3, kind: input, shape index: {}]
  %s4 = inlined_call_operand.vmem [shape: f32[4,1], index: 4, kind: input, shape index: {}]
  %s5 = inlined_call_operand.hbm [shape: f32[4,256], index: 5, kind: output, shape index: {}]
  %s6 = sld [smem:[#allocation0]]
  $region30: #{tpu_custom_call.1} parent=0
    _
  %s8 = ssub.s32 1, %s6
  %s9 = scalar_select 0, %s8, %s6
  $region1: #{tpu_custom_call.1} parent=0
    #allocation2 [shape = 'u8[4096]{0}', space=vmem, size = 0x1000, scoped, tag = 'output window, operand 0, single buffered']
    #allocation3 [shape = 's32[1]{0}', space=sflag, size = 0x4, scoped, tag = 'scoped memory for tpu_custom_call.1']
    %10 = vsyncpa [#allocation3], 0
    // Predicated region
    $region2: #{tpu_custom_call.1} parent=1 // pred_check
      _
    $region3: #{tpu_custom_call.1} parent=1 // pred_check_branch
      %12 = sbr.rel (0) target = $region5
    $region4: #{tpu_custom_call.1} parent=1 // pred_region
      _
    $region5: #{tpu_custom_call.1} parent=1 // pred_fallthru
      _
    // Predicated region
    $region6: #{tpu_custom_call.1} parent=1 // pred_check
      _
    $region7: #{tpu_custom_call.1} parent=1 // pred_check_branch
      %14 = sbr.rel (0) target = $region9
    $region8: #{tpu_custom_call.1} parent=1 // pred_region
      _
    $region9: #{tpu_custom_call.1} parent=1 // pred_fallthru
      _
    // Predicated region
    $region10: #{tpu_custom_call.1} parent=1 // pred_check
      _
    $region11: #{tpu_custom_call.1} parent=1 // pred_check_branch
      %16 = sbr.rel (0) target = $region13
    $region12: #{tpu_custom_call.1} parent=1 // pred_region
      _
    $region13: #{tpu_custom_call.1} parent=1 // pred_fallthru
      _
    // Predicated region
    $region14: #{tpu_custom_call.1} parent=1 // pred_check
      _
    $region15: #{tpu_custom_call.1} parent=1 // pred_check_branch
      %18 = sbr.rel (0) target = $region17
    $region16: #{tpu_custom_call.1} parent=1 // pred_region
      _
    $region17: #{tpu_custom_call.1} parent=1 // pred_fallthru
      _
    // Predicated region
    $region18: #{tpu_custom_call.1} parent=1 // pred_check
      _
    $region19: #{tpu_custom_call.1} parent=1 // pred_check_branch
      %20 = sbr.rel (0) target = $region21
    $region20: #{tpu_custom_call.1} parent=1 // pred_region
      _
    $region21: #{tpu_custom_call.1} parent=1 // pred_fallthru
      _
    %v21 = vld [vmem:[%s0] sm:$0xff]
    %v22 = vld [vmem:[%s0 + $0x8] sm:$0xff]
    %v23 = vld [vmem:[%s0 + $0x10] sm:$0xff]
    %v24 = vld [vmem:[%s0 + $0x18] sm:$0xff]
    %v25 = vld [vmem:[%s0 + $0x20] sm:$0xff]
    %v26 = vld [vmem:[%s0 + $0x28] sm:$0xff]
    %v27 = vld [vmem:[%s0 + $0x30] sm:$0xff]
    %v28 = vld [vmem:[%s0 + $0x38] sm:$0xff]
    %v29 = vld [vmem:[%s0 + $0x40] sm:$0xff]
    %v30 = vld [vmem:[%s0 + $0x48] sm:$0xff]
    %v31 = vld [vmem:[%s0 + $0x50] sm:$0xff]
    %v32 = vld [vmem:[%s0 + $0x58] sm:$0xff]
    %v33 = vld [vmem:[%s0 + $0x60] sm:$0xff]
    %v34 = vld [vmem:[%s0 + $0x68] sm:$0xff]
    %v35 = vld [vmem:[%s0 + $0x70] sm:$0xff]
    %v36 = vld [vmem:[%s0 + $0x78] sm:$0xff]
    %v37 = vld [vmem:[%s0 + $0x80] sm:$0xff]
    %v38 = vld [vmem:[%s0 + $0x88] sm:$0xff]
    %v39 = vld [vmem:[%s0 + $0x90] sm:$0xff]
    %v40 = vld [vmem:[%s0 + $0x98] sm:$0xff]
    %v41 = vld [vmem:[%s0 + $0xa0] sm:$0xff]
    %v42 = vld [vmem:[%s0 + $0xa8] sm:$0xff]
    %v43 = vld [vmem:[%s0 + $0xb0] sm:$0xff]
    %v44 = vld [vmem:[%s0 + $0xb8] sm:$0xff]
    %v45 = vld [vmem:[%s0 + $0xc0] sm:$0xff]
    %v46 = vld [vmem:[%s0 + $0xc8] sm:$0xff]
    %v47 = vld [vmem:[%s0 + $0xd0] sm:$0xff]
    %v48 = vld [vmem:[%s0 + $0xd8] sm:$0xff]
    %v49 = vld [vmem:[%s0 + $0xe0] sm:$0xff]
    %v50 = vld [vmem:[%s0 + $0xe8] sm:$0xff]
    %v51 = vld [vmem:[%s0 + $0xf0] sm:$0xff]
    %v52 = vld [vmem:[%s0 + $0xf8] sm:$0xff]
    %v53 = vld [vmem:[%s1] sm:$0xff]
    %v54 = vld [vmem:[%s2] sm:$0x1]
    %v56 = vperm.slane %v54, 0
    %vm58 = vcmask 64512
    %v60 = vsel %vm58, %v21, 0
    %v63 = vsel %vm58, %v22, 0
    %v66 = vsel %vm58, %v23, 0
    %v69 = vsel %vm58, %v24, 0
    %v72 = vsel %vm58, %v25, 0
    %v75 = vsel %vm58, %v26, 0
    %v78 = vsel %vm58, %v27, 0
    %v81 = vsel %vm58, %v28, 0
    %v84 = vsel %vm58, %v29, 0
    %v87 = vsel %vm58, %v30, 0
    %v90 = vsel %vm58, %v31, 0
    %v93 = vsel %vm58, %v32, 0
    %v96 = vsel %vm58, %v33, 0
    %v99 = vsel %vm58, %v34, 0
    %v102 = vsel %vm58, %v35, 0
    %v105 = vsel %vm58, %v36, 0
    %v108 = vsel %vm58, %v37, 0
    %v111 = vsel %vm58, %v38, 0
    %v114 = vsel %vm58, %v39, 0
    %v117 = vsel %vm58, %v40, 0
    %v120 = vsel %vm58, %v41, 0
    %v123 = vsel %vm58, %v42, 0
    %v126 = vsel %vm58, %v43, 0
    %v129 = vsel %vm58, %v44, 0
    %v132 = vsel %vm58, %v45, 0
    %v135 = vsel %vm58, %v46, 0
    %v138 = vsel %vm58, %v47, 0
    %v141 = vsel %vm58, %v48, 0
    %v144 = vsel %vm58, %v49, 0
    %v147 = vsel %vm58, %v50, 0
    %v150 = vsel %vm58, %v51, 0
    %v153 = vsel %vm58, %v52, 0
    %155 = vmatpush.msra.mxu0 0.0
    %156 = vmatpush.msra.mxu0 0.0
    %157 = vmatpush.msra.mxu0 0.0
    %158 = vmatpush.msra.mxu0 0.0
    %159 = vmatpush.msra.mxu0 0.0
    %160 = vmatpush.msra.mxu0 0.0
    %161 = vmatpush.msra.mxu0 0.0
    %162 = vmatpush.msra.mxu0 0.0
    %163 = vmatpush.msra.mxu0 0.0
    %164 = vmatpush.msra.mxu0 0.0
    %165 = vmatpush.msra.mxu0 0.0
    %166 = vmatpush.msra.mxu0 0.0
    %167 = vmatpush.msra.mxu0 0.0
    %168 = vmatpush.msra.mxu0 0.0
    %169 = vmatpush.msra.mxu0 0.0
    %170 = vmatpush.msra.mxu0 %v53
    %171 = vmatmul.f32.gmra.mxu0 %v60
    %v172 = vpop.f32.mrf.mxu0
    %v173 = vadd.f32 %v56, %v172
    %174 = vmatmul.f32.gmra.mxu0 %v63
    %v175 = vpop.f32.mrf.mxu0
    %v176 = vadd.f32 %v56, %v175
    %177 = vmatmul.f32.gmra.mxu0 %v66
    %v178 = vpop.f32.mrf.mxu0
    %v179 = vadd.f32 %v56, %v178
    %180 = vmatmul.f32.gmra.mxu0 %v69
    %v181 = vpop.f32.mrf.mxu0
    %v182 = vadd.f32 %v56, %v181
    %183 = vmatmul.f32.gmra.mxu0 %v72
    %v184 = vpop.f32.mrf.mxu0
    %v185 = vadd.f32 %v56, %v184
    %186 = vmatmul.f32.gmra.mxu0 %v75
    %v187 = vpop.f32.mrf.mxu0
    %v188 = vadd.f32 %v56, %v187
    %189 = vmatmul.f32.gmra.mxu0 %v78
    %v190 = vpop.f32.mrf.mxu0
    %v191 = vadd.f32 %v56, %v190
    %192 = vmatmul.f32.gmra.mxu0 %v81
    %v193 = vpop.f32.mrf.mxu0
    %v194 = vadd.f32 %v56, %v193
    %195 = vmatmul.f32.gmra.mxu0 %v84
    %v196 = vpop.f32.mrf.mxu0
    %v197 = vadd.f32 %v56, %v196
    %198 = vmatmul.f32.gmra.mxu0 %v87
    %v199 = vpop.f32.mrf.mxu0
    %v200 = vadd.f32 %v56, %v199
    %201 = vmatmul.f32.gmra.mxu0 %v90
    %v202 = vpop.f32.mrf.mxu0
    %v203 = vadd.f32 %v56, %v202
    %204 = vmatmul.f32.gmra.mxu0 %v93
    %v205 = vpop.f32.mrf.mxu0
    %v206 = vadd.f32 %v56, %v205
    %207 = vmatmul.f32.gmra.mxu0 %v96
    %v208 = vpop.f32.mrf.mxu0
    %v209 = vadd.f32 %v56, %v208
    %210 = vmatmul.f32.gmra.mxu0 %v99
    %v211 = vpop.f32.mrf.mxu0
    %v212 = vadd.f32 %v56, %v211
    %213 = vmatmul.f32.gmra.mxu0 %v102
    %v214 = vpop.f32.mrf.mxu0
    %v215 = vadd.f32 %v56, %v214
    %216 = vmatmul.f32.gmra.mxu0 %v105
    %v217 = vpop.f32.mrf.mxu0
    %v218 = vadd.f32 %v56, %v217
    %219 = vmatmul.f32.gmra.mxu0 %v108
    %v220 = vpop.f32.mrf.mxu0
    %v221 = vadd.f32 %v56, %v220
    %222 = vmatmul.f32.gmra.mxu0 %v111
    %v223 = vpop.f32.mrf.mxu0
    %v224 = vadd.f32 %v56, %v223
    %225 = vmatmul.f32.gmra.mxu0 %v114
    %v226 = vpop.f32.mrf.mxu0
    %v227 = vadd.f32 %v56, %v226
    %228 = vmatmul.f32.gmra.mxu0 %v117
    %v229 = vpop.f32.mrf.mxu0
    %v230 = vadd.f32 %v56, %v229
    %231 = vmatmul.f32.gmra.mxu0 %v120
    %v232 = vpop.f32.mrf.mxu0
    %v233 = vadd.f32 %v56, %v232
    %234 = vmatmul.f32.gmra.mxu0 %v123
    %v235 = vpop.f32.mrf.mxu0
    %v236 = vadd.f32 %v56, %v235
    %237 = vmatmul.f32.gmra.mxu0 %v126
    %v238 = vpop.f32.mrf.mxu0
    %v239 = vadd.f32 %v56, %v238
    %240 = vmatmul.f32.gmra.mxu0 %v129
    %v241 = vpop.f32.mrf.mxu0
    %v242 = vadd.f32 %v56, %v241
    %243 = vmatmul.f32.gmra.mxu0 %v132
    %v244 = vpop.f32.mrf.mxu0
    %v245 = vadd.f32 %v56, %v244
    %246 = vmatmul.f32.gmra.mxu0 %v135
    %v247 = vpop.f32.mrf.mxu0
    %v248 = vadd.f32 %v56, %v247
    %249 = vmatmul.f32.gmra.mxu0 %v138
    %v250 = vpop.f32.mrf.mxu0
    %v251 = vadd.f32 %v56, %v250
    %252 = vmatmul.f32.gmra.mxu0 %v141
    %v253 = vpop.f32.mrf.mxu0
    %v254 = vadd.f32 %v56, %v253
    %255 = vmatmul.f32.gmra.mxu0 %v144
    %v256 = vpop.f32.mrf.mxu0
    %v257 = vadd.f32 %v56, %v256
    %258 = vmatmul.f32.gmra.mxu0 %v147
    %v259 = vpop.f32.mrf.mxu0
    %v260 = vadd.f32 %v56, %v259
    %261 = vmatmul.f32.gmra.mxu0 %v150
    %v262 = vpop.f32.mrf.mxu0
    %v263 = vadd.f32 %v56, %v262
    %264 = vmatmul.f32.gmra.mxu0 %v153
    %v265 = vpop.f32.mrf.mxu0
    %v266 = vadd.f32 %v56, %v265
    %267 = vdwg.mxu0
    %vm268 = vcmp.gt.f32.partialorder %v173, 0.0
    %vm269 = vcmp.gt.f32.partialorder %v176, 0.0
    %vm270 = vcmp.gt.f32.partialorder %v179, 0.0
    %vm271 = vcmp.gt.f32.partialorder %v182, 0.0
    %vm272 = vcmp.gt.f32.partialorder %v185, 0.0
    %vm273 = vcmp.gt.f32.partialorder %v188, 0.0
    %vm274 = vcmp.gt.f32.partialorder %v191, 0.0
    %vm275 = vcmp.gt.f32.partialorder %v194, 0.0
    %vm276 = vcmp.gt.f32.partialorder %v197, 0.0
    %vm277 = vcmp.gt.f32.partialorder %v200, 0.0
    %vm278 = vcmp.gt.f32.partialorder %v203, 0.0
    %vm279 = vcmp.gt.f32.partialorder %v206, 0.0
    %vm280 = vcmp.gt.f32.partialorder %v209, 0.0
    %vm281 = vcmp.gt.f32.partialorder %v212, 0.0
    %vm282 = vcmp.gt.f32.partialorder %v215, 0.0
    %vm283 = vcmp.gt.f32.partialorder %v218, 0.0
    %vm284 = vcmp.gt.f32.partialorder %v221, 0.0
    %vm285 = vcmp.gt.f32.partialorder %v224, 0.0
    %vm286 = vcmp.gt.f32.partialorder %v227, 0.0
    %vm287 = vcmp.gt.f32.partialorder %v230, 0.0
    %vm288 = vcmp.gt.f32.partialorder %v233, 0.0
    %vm289 = vcmp.gt.f32.partialorder %v236, 0.0
    %vm290 = vcmp.gt.f32.partialorder %v239, 0.0
    %vm291 = vcmp.gt.f32.partialorder %v242, 0.0
    %vm292 = vcmp.gt.f32.partialorder %v245, 0.0
    %vm293 = vcmp.gt.f32.partialorder %v248, 0.0
    %vm294 = vcmp.gt.f32.partialorder %v251, 0.0
    %vm295 = vcmp.gt.f32.partialorder %v254, 0.0
    %vm296 = vcmp.gt.f32.partialorder %v257, 0.0
    %vm297 = vcmp.gt.f32.partialorder %v260, 0.0
    %vm298 = vcmp.gt.f32.partialorder %v263, 0.0
    %vm299 = vcmp.gt.f32.partialorder %v266, 0.0
    %v300 = vmul.f32 %v173, 0.2
    %v301 = vmul.f32 %v176, 0.2
    %v302 = vmul.f32 %v179, 0.2
    %v303 = vmul.f32 %v182, 0.2
    %v304 = vmul.f32 %v185, 0.2
    %v305 = vmul.f32 %v188, 0.2
    %v306 = vmul.f32 %v191, 0.2
    %v307 = vmul.f32 %v194, 0.2
    %v308 = vmul.f32 %v197, 0.2
    %v309 = vmul.f32 %v200, 0.2
    %v310 = vmul.f32 %v203, 0.2
    %v311 = vmul.f32 %v206, 0.2
    %v312 = vmul.f32 %v209, 0.2
    %v313 = vmul.f32 %v212, 0.2
    %v314 = vmul.f32 %v215, 0.2
    %v315 = vmul.f32 %v218, 0.2
    %v316 = vmul.f32 %v221, 0.2
    %v317 = vmul.f32 %v224, 0.2
    %v318 = vmul.f32 %v227, 0.2
    %v319 = vmul.f32 %v230, 0.2
    %v320 = vmul.f32 %v233, 0.2
    %v321 = vmul.f32 %v236, 0.2
    %v322 = vmul.f32 %v239, 0.2
    %v323 = vmul.f32 %v242, 0.2
    %v324 = vmul.f32 %v245, 0.2
    %v325 = vmul.f32 %v248, 0.2
    %v326 = vmul.f32 %v251, 0.2
    %v327 = vmul.f32 %v254, 0.2
    %v328 = vmul.f32 %v257, 0.2
    %v329 = vmul.f32 %v260, 0.2
    %v330 = vmul.f32 %v263, 0.2
    %v331 = vmul.f32 %v266, 0.2
    %v332 = vsel %vm268, %v173, %v300
    %v333 = vsel %vm269, %v176, %v301
    %v334 = vsel %vm270, %v179, %v302
    %v335 = vsel %vm271, %v182, %v303
    %v336 = vsel %vm272, %v185, %v304
    %v337 = vsel %vm273, %v188, %v305
    %v338 = vsel %vm274, %v191, %v306
    %v339 = vsel %vm275, %v194, %v307
    %v340 = vsel %vm276, %v197, %v308
    %v341 = vsel %vm277, %v200, %v309
    %v342 = vsel %vm278, %v203, %v310
    %v343 = vsel %vm279, %v206, %v311
    %v344 = vsel %vm280, %v209, %v312
    %v345 = vsel %vm281, %v212, %v313
    %v346 = vsel %vm282, %v215, %v314
    %v347 = vsel %vm283, %v218, %v315
    %v348 = vsel %vm284, %v221, %v316
    %v349 = vsel %vm285, %v224, %v317
    %v350 = vsel %vm286, %v227, %v318
    %v351 = vsel %vm287, %v230, %v319
    %v352 = vsel %vm288, %v233, %v320
    %v353 = vsel %vm289, %v236, %v321
    %v354 = vsel %vm290, %v239, %v322
    %v355 = vsel %vm291, %v242, %v323
    %v356 = vsel %vm292, %v245, %v324
    %v357 = vsel %vm293, %v248, %v325
    %v358 = vsel %vm294, %v251, %v326
    %v359 = vsel %vm295, %v254, %v327
    %v360 = vsel %vm296, %v257, %v328
    %v361 = vsel %vm297, %v260, %v329
    %v362 = vsel %vm298, %v263, %v330
    %v363 = vsel %vm299, %v266, %v331
    %v364 = vld [vmem:[%s3] sm:$0xf]
    %v365 = vld [vmem:[%s4] sm:$0xf]
    %367 = vset.pattern.permute.xlu0 0
    %368 = vperm.xlu0 %367, %v365
    %v369 = vpop.permute.xlu0 %368
    %371 = vmatpush.xpose.msra.mxu0 %v347
    %372 = vmatpush.xpose.msra.mxu0 %v346
    %373 = vmatpush.xpose.msra.mxu0 %v345
    %374 = vmatpush.xpose.msra.mxu0 %v344
    %375 = vmatpush.xpose.msra.mxu0 %v343
    %376 = vmatpush.xpose.msra.mxu0 %v342
    %377 = vmatpush.xpose.msra.mxu0 %v341
    %378 = vmatpush.xpose.msra.mxu0 %v340
    %379 = vmatpush.xpose.msra.mxu0 %v339
    %380 = vmatpush.xpose.msra.mxu0 %v338
    %381 = vmatpush.xpose.msra.mxu0 %v337
    %382 = vmatpush.xpose.msra.mxu0 %v336
    %383 = vmatpush.xpose.msra.mxu0 %v335
    %384 = vmatpush.xpose.msra.mxu0 %v334
    %385 = vmatpush.xpose.msra.mxu0 %v333
    %386 = vmatpush.xpose.msra.mxu0 %v332
    %387 = vmatmul.f32.gmra.mxu0 %v364
    %v388 = vpop.f32.mrf.mxu0
    %v389 = vadd.f32 %v369, %v388
    %390 = vdwg.mxu0
    %391 = vmatpush.xpose.msra.mxu0 %v363
    %392 = vmatpush.xpose.msra.mxu0 %v362
    %393 = vmatpush.xpose.msra.mxu0 %v361
    %394 = vmatpush.xpose.msra.mxu0 %v360
    %395 = vmatpush.xpose.msra.mxu0 %v359
    %396 = vmatpush.xpose.msra.mxu0 %v358
    %397 = vmatpush.xpose.msra.mxu0 %v357
    %398 = vmatpush.xpose.msra.mxu0 %v356
    %399 = vmatpush.xpose.msra.mxu0 %v355
    %400 = vmatpush.xpose.msra.mxu0 %v354
    %401 = vmatpush.xpose.msra.mxu0 %v353
    %402 = vmatpush.xpose.msra.mxu0 %v352
    %403 = vmatpush.xpose.msra.mxu0 %v351
    %404 = vmatpush.xpose.msra.mxu0 %v350
    %405 = vmatpush.xpose.msra.mxu0 %v349
    %406 = vmatpush.xpose.msra.mxu0 %v348
    %407 = vmatmul.f32.gmra.mxu0 %v364
    %v408 = vpop.f32.mrf.mxu0
    %v409 = vadd.f32 %v369, %v408
    %410 = vdwg.mxu0
    %v411 = vtanh.pop %v389
    %v412 = vtanh.pop %v409
    %v413 = vmul.f32 %v411, 2.0
    %v414 = vmul.f32 %v412, 2.0
    %v417 = vrot.slane %v414, 4
    %vm418 = vcmask 1043456
    %v419 = vsel %vm418, %v413, %v417
    %421 = vst [vmem:[#allocation2] sm:$0xff] %v419
    // Predicated region
    $region22: #{tpu_custom_call.1} parent=1 // pred_check
      _
    $region23: #{tpu_custom_call.1} parent=1 // pred_check_branch
      %423 = sbr.rel (0) target = $region25
    $region24: #{tpu_custom_call.1} parent=1 // pred_region
      %425 = vsyncadd [#allocation3], 0
      %s427 = sshll.u32 [#allocation2], 4
      %s428 = int_to_ptr.vmem [resolvable:$true] %s427
      %s429 = sshll.u32 %s5, 4
      %s430 = int_to_ptr.hbm [resolvable:$true] %s429
      %432 = dma.vmem_to_hbm [thread:$0]  %s428, 128, %s430, [#allocation3]
    $region25: #{tpu_custom_call.1} parent=1 // pred_fallthru
      _
    // Predicated region
    $region26: #{tpu_custom_call.1} parent=1 // pred_check
      _
    $region27: #{tpu_custom_call.1} parent=1 // pred_check_branch
      %434 = sbr.rel (0) target = $region29
    $region28: #{tpu_custom_call.1} parent=1 // pred_region
      %436 = dma.done [#allocation3], 128
    $region29: #{tpu_custom_call.1} parent=1 // pred_fallthru
      _
    %437 = vsyncpa [#allocation3], 1

</llo_original>
